<compile_context>
chip_gen: v7x
topology: tpu7x:2x2x1
jax: 0.10.0
libtpu: 0.0.40
codegen_flags: <defaults>
</compile_context>

<pallas_src>
import functools

import jax
import jax.numpy as jnp
from jax import lax
from jax.experimental import pallas as pl
from jax.experimental.pallas import tpu as pltpu

_LANES = 128
_ACC_ROWS = 32          # accumulator sublane extent: 4 f32 vregs per output slab


def _default_parts():
    """Use a 2-way grid partition only on chips with two TensorCores (v7x)."""
    try:
        kind = jax.devices()[0].device_kind.lower()
    except Exception:
        return 1
    return 2 if "v7" in kind else 1


@functools.partial(
    jax.jit, static_argnames=("block_rows", "parts", "min_pallas_elems"))
def _scalar_update(xs, total, count, *, block_rows, parts, min_pallas_elems):
    """One fused device step: fold a batch of observations into (total, count).

    Returns (new_total, new_count, new_total / new_count).  All shape-derived
    quantities are Python ints at trace time; each distinct batch length
    compiles once (feed consistent / bucketed batch sizes if lengths vary a lot).
    """
    xs = xs.reshape(-1)
    if not jnp.issubdtype(xs.dtype, jnp.floating):
        xs = xs.astype(jnp.float32)
    n = xs.shape[0]

    def fold(batch_sum, batch_cnt):
        new_total = total + batch_sum
        new_count = count + batch_cnt
        return new_total, new_count, new_total / new_count

    # ---- Small-batch fast path: one fused XLA expression, no Pallas launch.
    if n < max(int(min_pallas_elems), _ACC_ROWS * _LANES):
        xf = xs.astype(jnp.float32)
        return fold(jnp.sum(xf), jnp.sum((xf != 0.0).astype(jnp.float32)))

    # ---- Pallas streaming-reduction path.
    rows = n // _LANES                       # lane-dense rows available
    rem = n - rows * _LANES                  # sub-128 remainder (handled in jnp)

    br = max(_ACC_ROWS, (int(block_rows) // _ACC_ROWS) * _ACC_ROWS)
    br = min(br, (rows // _ACC_ROWS) * _ACC_ROWS)    # multiple of 32, <= rows
    tiles = -(-rows // br)                           # cdiv
    parts_eff = max(1, min(int(parts), tiles))
    tiles_pp = -(-tiles // parts_eff)
    # True iff the grid covers more logical rows than exist -> need the mask.
    needs_mask = parts_eff * tiles_pp * br != rows

    # Free reshape when n is already a multiple of 128; otherwise one prefix
    # slice (the only extra copy on this path -- aligned batch sizes avoid it).
    main = xs if rem == 0 else xs[: rows * _LANES]
    main2d = main.reshape(rows, _LANES)

    def kernel(x_ref, sum_ref, cnt_ref):
        @pl.when(pl.program_id(1) == 0)
        def _init():
            sum_ref[...] = jnp.zeros_like(sum_ref)
            cnt_ref[...] = jnp.zeros_like(cnt_ref)

        x = x_ref[...].astype(jnp.float32)           # (br, 128), upcast on VPU
        if needs_mask:
            # Zero out rows past the true extent (garbage of the partial final
            # tile / clamped over-partition tiles).  Generated only when the
            # tiling is ragged.
            row0 = (pl.program_id(0) * tiles_pp + pl.program_id(1)) * br
            ridx = row0 + lax.broadcasted_iota(jnp.int32, x.shape, 0)
            x = jnp.where(ridx < rows, x, 0.0)

        nz = (x != 0.0).astype(jnp.int32)            # `if not scalar.eq(0.0)`
        # Fold br rows into a (32, 128) slab: independent per-vreg add chains,
        # pure VPU, no cross-lane work.  Zeros add nothing to the sum, so no
        # select is needed on the value path.
        sum_ref[...] += jnp.sum(x.reshape(-1, _ACC_ROWS, _LANES), axis=0)[None]
        cnt_ref[...] += jnp.sum(nz.reshape(-1, _ACC_ROWS, _LANES), axis=0)[None]

    def in_map(p, i):
        # Clamp so a trailing over-partition block never indexes past the
        # array; its contribution is zeroed by the row mask above.
        return (jnp.minimum(p * tiles_pp + i, tiles - 1), 0)

    psum, pcnt = pl.pallas_call(
        kernel,
        out_shape=(
            jax.ShapeDtypeStruct((parts_eff, _ACC_ROWS, _LANES), jnp.float32),
            jax.ShapeDtypeStruct((parts_eff, _ACC_ROWS, _LANES), jnp.int32),
        ),
        grid_spec=pltpu.PrefetchScalarGridSpec(
            num_scalar_prefetch=0,
            grid=(parts_eff, tiles_pp),
            in_specs=[pl.BlockSpec((br, _LANES), in_map)],
            out_specs=(
                pl.BlockSpec((1, _ACC_ROWS, _LANES), lambda p, i: (p, 0, 0)),
                pl.BlockSpec((1, _ACC_ROWS, _LANES), lambda p, i: (p, 0, 0)),
            ),
        ),
        compiler_params=pltpu.CompilerParams(
            dimension_semantics=("parallel", "arbitrary")),
    )(main2d)

    # Final scalar reductions + state fold + single divide, fused in this jit.
    batch_sum = jnp.sum(psum)
    batch_cnt = jnp.sum(pcnt).astype(jnp.float32)
    if rem:
        tail = xs[rows * _LANES:].astype(jnp.float32)    # < 128 elements
        batch_sum = batch_sum + jnp.sum(tail)
        batch_cnt = batch_cnt + jnp.sum((tail != 0.0).astype(jnp.float32))
    return fold(batch_sum, batch_cnt)


class Scalar:
    """JAX/Pallas port of the PyTorch `Scalar` running-average module.

    State (`total`, `count`) stays on device as (1,) float32 buffers, like the
    registered FloatTensor buffers.  `forward(scalar)` keeps the original
    one-observation-per-call semantics (fast fused path, no Pallas dispatch);
    `update(scalars)` folds a whole batch with at most one Pallas launch.
    """

    def __init__(self, block_rows=1024, parts=None, min_pallas_elems=65536):
        self.total = jnp.zeros((1,), dtype=jnp.float32)
        self.count = jnp.zeros((1,), dtype=jnp.float32)
        self._block_rows = int(block_rows)
        self._parts = _default_parts() if parts is None else int(parts)
        self._min_pallas_elems = int(min_pallas_elems)

    def update(self, scalars):
        xs = jnp.asarray(scalars)
        new_total, new_count, value = _scalar_update(
            xs, self.total, self.count,
            block_rows=self._block_rows, parts=self._parts,
            min_pallas_elems=self._min_pallas_elems)
        # Buffer mutation (like the in-place += on registered buffers).
        self.total, self.count = new_total, new_count
        return value

    def forward(self, scalar):
        # Original entry point: one observation per call.
        # (.cpu() in PyTorch -> just return the device array here.)
        return self.update(jnp.asarray(scalar, dtype=jnp.float32).reshape(1))

    __call__ = forward

    @property
    def value(self):
        return self.total / self.count

    def clear(self):
        self.total = jnp.zeros((1,), dtype=jnp.float32)
        self.count = jnp.zeros((1,), dtype=jnp.float32)


if __name__ == "__main__":
    import numpy as np

    key = jax.random.PRNGKey(0)
    k1, k2 = jax.random.split(key)

    m = Scalar()

    # Batch 1: aligned size -> zero-copy reshape, exact tiling (no mask/tail).
    x1 = jax.random.normal(k1, (131072,), dtype=jnp.float32)
    x1 = x1.at[::7].set(0.0)                      # exact zeros must be skipped
    v1 = jax.block_until_ready(m.update(x1))

    # Batch 2: awkward size + native bf16 streaming -> ragged final tile
    # (in-kernel iota mask) + sub-128 remainder folded in jnp.
    x2 = jax.random.normal(k2, (70000,), dtype=jnp.bfloat16)
    x2 = x2.at[::5].set(0.0)
    v2 = jax.block_until_ready(m.update(x2))

    # Original per-observation forward(): fused fast path, no Pallas dispatch.
    v3 = jax.block_until_ready(m.forward(jnp.float32(2.5)))
    v4 = jax.block_until_ready(m.forward(jnp.float32(0.0)))   # zero -> skipped

    # float64 numpy reference (bf16 -> f32 is exact, so this is bit-faithful
    # to the observations the module actually saw).
    a1 = np.asarray(x1, dtype=np.float64)
    a2 = np.asarray(jnp.asarray(x2, jnp.float32), dtype=np.float64)
    obs = np.concatenate([a1, a2, np.array([2.5, 0.0], dtype=np.float64)])
    nz = obs[obs != 0.0]
    ref_total, ref_count = nz.sum(), float(nz.size)

    got_total = float(np.asarray(m.total)[0])
    got_count = float(np.asarray(m.count)[0])
    got_value = float(np.asarray(v4)[0])

    assert np.allclose(got_count, ref_count), (got_count, ref_count)
    assert np.allclose(got_total, ref_total, rtol=1e-4, atol=5e-2), (got_total, ref_total)
    assert np.allclose(got_value, ref_total / ref_count, rtol=1e-4, atol=1e-5), (
        got_value, ref_total / ref_count)

    nz1 = a1[a1 != 0.0]                           # value after the first batch
    assert np.allclose(float(np.asarray(v1)[0]), nz1.sum() / nz1.size,
                       rtol=1e-4, atol=1e-5)

    print("KERNEL_OK")
</pallas_src>

<mosaic_0001>
module attributes {stable_mosaic.version = 11 : i64} {
  func.func @kernel(%arg0: i32, %arg1: i32, %arg2: memref<1024x128xf32, #tpu.memory_space<vmem>>, %arg3: memref<1x32x128xf32, #tpu.memory_space<vmem>>, %arg4: memref<1x32x128xi32, #tpu.memory_space<vmem>>) attributes {dimension_semantics = [#tpu.dimension_semantics<parallel>, #tpu.dimension_semantics<arbitrary>], iteration_bounds = array<i64: 1, 1>, scalar_prefetch = 0 : i64, scratch_operands = 0 : i64, tpu.core_type = #tpu.core_type<tc>, window_params = [{transform_indices = @transform_0, window_bounds = array<i64: 1024, 128>}, {transform_indices = @transform_1, window_bounds = array<i64: 1, 32, 128>}, {transform_indices = @transform_2, window_bounds = array<i64: 1, 32, 128>}]} {
    %c0_i32 = arith.constant 0 : i32
    %0 = arith.cmpi eq, %arg1, %c0_i32 : i32
    %1 = arith.extui %0 : i1 to i32
    %c0_i32_0 = arith.constant 0 : i32
    %2 = arith.cmpi ne, %1, %c0_i32_0 : i32
    scf.if %2 {
      %cst_16 = arith.constant 0.000000e+00 : f32
      %19 = vector.broadcast %cst_16 : f32 to vector<1x32x128xf32>
      %c0_17 = arith.constant 0 : index
      %c0_18 = arith.constant 0 : index
      %c0_19 = arith.constant 0 : index
      %20 = vector.load %arg3[%c0_17, %c0_18, %c0_19] : memref<1x32x128xf32, #tpu.memory_space<vmem>>, vector<1x32x128xf32>
      tpu.vector_store %arg3[%c0_17, %c0_18, %c0_19], %19 {strides = array<i32>} : memref<1x32x128xf32, #tpu.memory_space<vmem>>, vector<1x32x128xf32>,
      %c0_i32_20 = arith.constant 0 : i32
      %21 = vector.broadcast %c0_i32_20 : i32 to vector<1x32x128xi32>
      %c0_21 = arith.constant 0 : index
      %c0_22 = arith.constant 0 : index
      %c0_23 = arith.constant 0 : index
      %22 = vector.load %arg4[%c0_21, %c0_22, %c0_23] : memref<1x32x128xi32, #tpu.memory_space<vmem>>, vector<1x32x128xi32>
      tpu.vector_store %arg4[%c0_21, %c0_22, %c0_23], %21 {strides = array<i32>} : memref<1x32x128xi32, #tpu.memory_space<vmem>>, vector<1x32x128xi32>,
    } else {
    }
    %c0 = arith.constant 0 : index
    %c0_1 = arith.constant 0 : index
    %3 = vector.load %arg2[%c0, %c0_1] : memref<1024x128xf32, #tpu.memory_space<vmem>>, vector<1024x128xf32>
    %cst = arith.constant 0.000000e+00 : f32
    %4 = vector.broadcast %cst : f32 to vector<1024x128xf32>
    %5 = arith.cmpf one, %3, %4 : vector<1024x128xf32>
    %6 = arith.extui %5 : vector<1024x128xi1> to vector<1024x128xi32>
    %c0_2 = arith.constant 0 : index
    %c0_3 = arith.constant 0 : index
    %c0_4 = arith.constant 0 : index
    %7 = vector.load %arg3[%c0_2, %c0_3, %c0_4] : memref<1x32x128xf32, #tpu.memory_space<vmem>>, vector<1x32x128xf32>
    %8 = vector.shape_cast %3 : vector<1024x128xf32> to vector<32x32x128xf32>
    %cst_5 = arith.constant dense<0.000000e+00> : vector<32x128xf32>
    %9 = vector.multi_reduction <add>, %8, %cst_5 [0] : vector<32x32x128xf32> to vector<32x128xf32>
    %10 = vector.shape_cast %9 : vector<32x128xf32> to vector<1x32x128xf32>
    %11 = arith.addf %7, %10 : vector<1x32x128xf32>
    %c0_6 = arith.constant 0 : index
    %c0_7 = arith.constant 0 : index
    %c0_8 = arith.constant 0 : index
    %12 = vector.load %arg3[%c0_6, %c0_7, %c0_8] : memref<1x32x128xf32, #tpu.memory_space<vmem>>, vector<1x32x128xf32>
    tpu.vector_store %arg3[%c0_6, %c0_7, %c0_8], %11 {strides = array<i32>} : memref<1x32x128xf32, #tpu.memory_space<vmem>>, vector<1x32x128xf32>,
    %c0_9 = arith.constant 0 : index
    %c0_10 = arith.constant 0 : index
    %c0_11 = arith.constant 0 : index
    %13 = vector.load %arg4[%c0_9, %c0_10, %c0_11] : memref<1x32x128xi32, #tpu.memory_space<vmem>>, vector<1x32x128xi32>
    %14 = vector.shape_cast %6 : vector<1024x128xi32> to vector<32x32x128xi32>
    %cst_12 = arith.constant dense<0> : vector<32x128xi32>
    %15 = vector.multi_reduction <add>, %14, %cst_12 [0] : vector<32x32x128xi32> to vector<32x128xi32>
    %16 = vector.shape_cast %15 : vector<32x128xi32> to vector<1x32x128xi32>
    %17 = arith.addi %13, %16 : vector<1x32x128xi32>
    %c0_13 = arith.constant 0 : index
    %c0_14 = arith.constant 0 : index
    %c0_15 = arith.constant 0 : index
    %18 = vector.load %arg4[%c0_13, %c0_14, %c0_15] : memref<1x32x128xi32, #tpu.memory_space<vmem>>, vector<1x32x128xi32>
    tpu.vector_store %arg4[%c0_13, %c0_14, %c0_15], %17 {strides = array<i32>} : memref<1x32x128xi32, #tpu.memory_space<vmem>>, vector<1x32x128xi32>,
    return
  }
  func.func @transform_0(%arg0: i32, %arg1: i32) -> (i32, i32) {
    %c1_i32 = arith.constant 1 : i32
    %0 = arith.muli %arg0, %c1_i32 : i32
    %1 = arith.addi %0, %arg1 : i32
    %c0_i32 = arith.constant 0 : i32
    %2 = arith.minsi %1, %c0_i32 : i32
    %c0_i32_0 = arith.constant 0 : i32
    %c0_i32_1 = arith.constant 0 : i32
    return %2, %c0_i32_0 : i32, i32
  }
  func.func @transform_1(%arg0: i32, %arg1: i32) -> (i32, i32, i32) {
    %c0_i32 = arith.constant 0 : i32
    %c0_i32_0 = arith.constant 0 : i32
    %c0_i32_1 = arith.constant 0 : i32
    return %arg0, %c0_i32, %c0_i32_0 : i32, i32, i32
  }
  func.func @transform_2(%arg0: i32, %arg1: i32) -> (i32, i32, i32) {
    %c0_i32 = arith.constant 0 : i32
    %c0_i32_0 = arith.constant 0 : i32
    %c0_i32_1 = arith.constant 0 : i32
    return %arg0, %c0_i32, %c0_i32_0 : i32, i32, i32
  }
}

</mosaic_0001>

<llo_original>
// kernel: _scalar_update.1
$region0: #{_scalar_update.1}
  #allocation0 [shape = 'u32[]', space=smem, size = 0x4, offset = 0x4, fixed_abs, tag = 'smem constant byte address 0x4 - core index']
  #allocation1 [shape = 'u32[144,128]{1,0:T(1,128)}', space=vmem, size = 0x12000, scoped, tag = 'internal scratch']
  %s0 = inlined_call_operand.hbm [shape: f32[1024,128], index: 0, kind: input, shape index: {}]
  %s1 = inlined_call_operand.vmem [shape: f32[1,32,128], index: 1, kind: output, shape index: {0}]
  %s2 = inlined_call_operand.vmem [shape: s32[1,32,128], index: 2, kind: output, shape index: {1}]
  %3 = xla_tuple %s1, %s2
  %s4 = sld [smem:[#allocation0]]
  $region30: #{_scalar_update.1} parent=0
    _
  %s6 = ssub.s32 1, %s4
  %s7 = scalar_select 0, %s6, %s4
  $region1: #{_scalar_update.1} parent=0
    #allocation2 [shape = 'u8[524288]{0}', space=vmem, size = 0x80000, scoped, tag = 'input window, operand 0, single buffered']
    #allocation3 [shape = 's32[1]{0}', space=sflag, size = 0x4, scoped, tag = 'scoped memory for _scalar_update.1']
    %8 = vsyncpa [#allocation3], 0
    // Predicated region
    $region2: #{_scalar_update.1} parent=1 // pred_check
      _
    $region3: #{_scalar_update.1} parent=1 // pred_check_branch
      %10 = sbr.rel (0) target = $region5
    $region4: #{_scalar_update.1} parent=1 // pred_region
      %s11 = sadd.s32 0, 0
      %p12 = scmp.lt.s32.totalorder %s11, 0
      %s13 = scalar_select %p12, %s11, 0
      %s14 = smul.u32 128, %s13
      %s16 = ssub.s32 16384, 16384
      %17 = vsyncadd [#allocation3], %s16
      %s18 = smul.addr %s14, 128
      %s19 = scalar_lea.hbm %s0, %s18
      %s20 = sshll.u32 [#allocation2], 4
      %s21 = int_to_ptr.vmem [resolvable:$true] %s20
      %26 = dma.hbm_to_vmem [thread:$0]  %s19, 16384, %s21, [#allocation3], 128, 128, 8
    $region5: #{_scalar_update.1} parent=1 // pred_fallthru
      _
    // Predicated region
    $region6: #{_scalar_update.1} parent=1 // pred_check
      _
    $region7: #{_scalar_update.1} parent=1 // pred_check_branch
      %28 = sbr.rel (0) target = $region9
    $region8: #{_scalar_update.1} parent=1 // pred_region
      %29 = dma.done [#allocation3], 16384
    $region9: #{_scalar_update.1} parent=1 // pred_fallthru
      _
    %s30 = sadd.s32 0, 0
    %p31 = scmp.lt.s32.totalorder %s30, 0
    %s32 = scalar_select %p31, %s30, 0
    %s33 = smul.u32 128, %s32
    %p34 = scmp.eq.s32.totalorder 0, 0
    // Predicated region
    $region10: #{_scalar_update.1} parent=1 // pred_check
      %p35 = pneg %p34
    $region11: #{_scalar_update.1} parent=1 // pred_check_branch
      %37 = sbr.rel (%p35) target = $region13
    $region12: #{_scalar_update.1} parent=1 // pred_region
      %38 = vst [vmem:[%s1] sm:$0xff] 0.0
      %39 = vst [vmem:[%s1 + $0x8] sm:$0xff] 0.0
      %40 = vst [vmem:[%s1 + $0x10] sm:$0xff] 0.0
      %41 = vst [vmem:[%s1 + $0x18] sm:$0xff] 0.0
      %42 = vst [vmem:[%s2] sm:$0xff] 0
      %43 = vst [vmem:[%s2 + $0x8] sm:$0xff] 0
      %44 = vst [vmem:[%s2 + $0x10] sm:$0xff] 0
      %45 = vst [vmem:[%s2 + $0x18] sm:$0xff] 0
    $region13: #{_scalar_update.1} parent=1 // pred_fallthru
      _
    %v46 = vld [vmem:[#allocation2] sm:$0xff]
    %v47 = vld [vmem:[#allocation2 + $0x8] sm:$0xff]
    %v48 = vld [vmem:[#allocation2 + $0x10] sm:$0xff]
    %v49 = vld [vmem:[#allocation2 + $0x18] sm:$0xff]
    %v50 = vld [vmem:[#allocation2 + $0x20] sm:$0xff]
    %v51 = vld [vmem:[#allocation2 + $0x28] sm:$0xff]
    %v52 = vld [vmem:[#allocation2 + $0x30] sm:$0xff]
    %v53 = vld [vmem:[#allocation2 + $0x38] sm:$0xff]
    %v54 = vld [vmem:[#allocation2 + $0x40] sm:$0xff]
    %v55 = vld [vmem:[#allocation2 + $0x48] sm:$0xff]
    %v56 = vld [vmem:[#allocation2 + $0x50] sm:$0xff]
    %v57 = vld [vmem:[#allocation2 + $0x58] sm:$0xff]
    %v58 = vld [vmem:[#allocation2 + $0x60] sm:$0xff]
    %v59 = vld [vmem:[#allocation2 + $0x68] sm:$0xff]
    %v60 = vld [vmem:[#allocation2 + $0x70] sm:$0xff]
    %v61 = vld [vmem:[#allocation2 + $0x78] sm:$0xff]
    %v62 = vld [vmem:[#allocation2 + $0x80] sm:$0xff]
    %v63 = vld [vmem:[#allocation2 + $0x88] sm:$0xff]
    %v64 = vld [vmem:[#allocation2 + $0x90] sm:$0xff]
    %v65 = vld [vmem:[#allocation2 + $0x98] sm:$0xff]
    %v66 = vld [vmem:[#allocation2 + $0xa0] sm:$0xff]
    %v67 = vld [vmem:[#allocation2 + $0xa8] sm:$0xff]
    %v68 = vld [vmem:[#allocation2 + $0xb0] sm:$0xff]
    %v69 = vld [vmem:[#allocation2 + $0xb8] sm:$0xff]
    %v70 = vld [vmem:[#allocation2 + $0xc0] sm:$0xff]
    %v71 = vld [vmem:[#allocation2 + $0xc8] sm:$0xff]
    %v72 = vld [vmem:[#allocation2 + $0xd0] sm:$0xff]
    %v73 = vld [vmem:[#allocation2 + $0xd8] sm:$0xff]
    %v74 = vld [vmem:[#allocation2 + $0xe0] sm:$0xff]
    %v75 = vld [vmem:[#allocation2 + $0xe8] sm:$0xff]
    %v76 = vld [vmem:[#allocation2 + $0xf0] sm:$0xff]
    %v77 = vld [vmem:[#allocation2 + $0xf8] sm:$0xff]
    %v78 = vld [vmem:[#allocation2 + $0x100] sm:$0xff]
    %v79 = vld [vmem:[#allocation2 + $0x108] sm:$0xff]
    %v80 = vld [vmem:[#allocation2 + $0x110] sm:$0xff]
    %v81 = vld [vmem:[#allocation2 + $0x118] sm:$0xff]
    %v82 = vld [vmem:[#allocation2 + $0x120] sm:$0xff]
    %v83 = vld [vmem:[#allocation2 + $0x128] sm:$0xff]
    %v84 = vld [vmem:[#allocation2 + $0x130] sm:$0xff]
    %v85 = vld [vmem:[#allocation2 + $0x138] sm:$0xff]
    %v86 = vld [vmem:[#allocation2 + $0x140] sm:$0xff]
    %v87 = vld [vmem:[#allocation2 + $0x148] sm:$0xff]
    %v88 = vld [vmem:[#allocation2 + $0x150] sm:$0xff]
    %v89 = vld [vmem:[#allocation2 + $0x158] sm:$0xff]
    %v90 = vld [vmem:[#allocation2 + $0x160] sm:$0xff]
    %v91 = vld [vmem:[#allocation2 + $0x168] sm:$0xff]
    %v92 = vld [vmem:[#allocation2 + $0x170] sm:$0xff]
    %v93 = vld [vmem:[#allocation2 + $0x178] sm:$0xff]
    %v94 = vld [vmem:[#allocation2 + $0x180] sm:$0xff]
    %v95 = vld [vmem:[#allocation2 + $0x188] sm:$0xff]
    %v96 = vld [vmem:[#allocation2 + $0x190] sm:$0xff]
    %v97 = vld [vmem:[#allocation2 + $0x198] sm:$0xff]
    %v98 = vld [vmem:[#allocation2 + $0x1a0] sm:$0xff]
    %v99 = vld [vmem:[#allocation2 + $0x1a8] sm:$0xff]
    %v100 = vld [vmem:[#allocation2 + $0x1b0] sm:$0xff]
    %v101 = vld [vmem:[#allocation2 + $0x1b8] sm:$0xff]
    %v102 = vld [vmem:[#allocation2 + $0x1c0] sm:$0xff]
    %v103 = vld [vmem:[#allocation2 + $0x1c8] sm:$0xff]
    %v104 = vld [vmem:[#allocation2 + $0x1d0] sm:$0xff]
    %v105 = vld [vmem:[#allocation2 + $0x1d8] sm:$0xff]
    %v106 = vld [vmem:[#allocation2 + $0x1e0] sm:$0xff]
    %v107 = vld [vmem:[#allocation2 + $0x1e8] sm:$0xff]
    %v108 = vld [vmem:[#allocation2 + $0x1f0] sm:$0xff]
    %v109 = vld [vmem:[#allocation2 + $0x1f8] sm:$0xff]
    %v110 = vld [vmem:[#allocation2 + $0x200] sm:$0xff]
    %v111 = vld [vmem:[#allocation2 + $0x208] sm:$0xff]
    %v112 = vld [vmem:[#allocation2 + $0x210] sm:$0xff]
    %v113 = vld [vmem:[#allocation2 + $0x218] sm:$0xff]
    %v114 = vld [vmem:[#allocation2 + $0x220] sm:$0xff]
    %v115 = vld [vmem:[#allocation2 + $0x228] sm:$0xff]
    %v116 = vld [vmem:[#allocation2 + $0x230] sm:$0xff]
    %v117 = vld [vmem:[#allocation2 + $0x238] sm:$0xff]
    %v118 = vld [vmem:[#allocation2 + $0x240] sm:$0xff]
    %v119 = vld [vmem:[#allocation2 + $0x248] sm:$0xff]
    %v120 = vld [vmem:[#allocation2 + $0x250] sm:$0xff]
    %v121 = vld [vmem:[#allocation2 + $0x258] sm:$0xff]
    %v122 = vld [vmem:[#allocation2 + $0x260] sm:$0xff]
    %v123 = vld [vmem:[#allocation2 + $0x268] sm:$0xff]
    %v124 = vld [vmem:[#allocation2 + $0x270] sm:$0xff]
    %v125 = vld [vmem:[#allocation2 + $0x278] sm:$0xff]
    %v126 = vld [vmem:[#allocation2 + $0x280] sm:$0xff]
    %v127 = vld [vmem:[#allocation2 + $0x288] sm:$0xff]
    %v128 = vld [vmem:[#allocation2 + $0x290] sm:$0xff]
    %v129 = vld [vmem:[#allocation2 + $0x298] sm:$0xff]
    %v130 = vld [vmem:[#allocation2 + $0x2a0] sm:$0xff]
    %v131 = vld [vmem:[#allocation2 + $0x2a8] sm:$0xff]
    %v132 = vld [vmem:[#allocation2 + $0x2b0] sm:$0xff]
    %v133 = vld [vmem:[#allocation2 + $0x2b8] sm:$0xff]
    %v134 = vld [vmem:[#allocation2 + $0x2c0] sm:$0xff]
    %v135 = vld [vmem:[#allocation2 + $0x2c8] sm:$0xff]
    %v136 = vld [vmem:[#allocation2 + $0x2d0] sm:$0xff]
    %v137 = vld [vmem:[#allocation2 + $0x2d8] sm:$0xff]
    %v138 = vld [vmem:[#allocation2 + $0x2e0] sm:$0xff]
    %v139 = vld [vmem:[#allocation2 + $0x2e8] sm:$0xff]
    %v140 = vld [vmem:[#allocation2 + $0x2f0] sm:$0xff]
    %v141 = vld [vmem:[#allocation2 + $0x2f8] sm:$0xff]
    %v142 = vld [vmem:[#allocation2 + $0x300] sm:$0xff]
    %v143 = vld [vmem:[#allocation2 + $0x308] sm:$0xff]
    %v144 = vld [vmem:[#allocation2 + $0x310] sm:$0xff]
    %v145 = vld [vmem:[#allocation2 + $0x318] sm:$0xff]
    %v146 = vld [vmem:[#allocation2 + $0x320] sm:$0xff]
    %v147 = vld [vmem:[#allocation2 + $0x328] sm:$0xff]
    %v148 = vld [vmem:[#allocation2 + $0x330] sm:$0xff]
    %v149 = vld [vmem:[#allocation2 + $0x338] sm:$0xff]
    %v150 = vld [vmem:[#allocation2 + $0x340] sm:$0xff]
    %v151 = vld [vmem:[#allocation2 + $0x348] sm:$0xff]
    %v152 = vld [vmem:[#allocation2 + $0x350] sm:$0xff]
    %v153 = vld [vmem:[#allocation2 + $0x358] sm:$0xff]
    %v154 = vld [vmem:[#allocation2 + $0x360] sm:$0xff]
    %v155 = vld [vmem:[#allocation2 + $0x368] sm:$0xff]
    %v156 = vld [vmem:[#allocation2 + $0x370] sm:$0xff]
    %v157 = vld [vmem:[#allocation2 + $0x378] sm:$0xff]
    %v158 = vld [vmem:[#allocation2 + $0x380] sm:$0xff]
    %v159 = vld [vmem:[#allocation2 + $0x388] sm:$0xff]
    %v160 = vld [vmem:[#allocation2 + $0x390] sm:$0xff]
    %v161 = vld [vmem:[#allocation2 + $0x398] sm:$0xff]
    %v162 = vld [vmem:[#allocation2 + $0x3a0] sm:$0xff]
    %v163 = vld [vmem:[#allocation2 + $0x3a8] sm:$0xff]
    %v164 = vld [vmem:[#allocation2 + $0x3b0] sm:$0xff]
    %v165 = vld [vmem:[#allocation2 + $0x3b8] sm:$0xff]
    %v166 = vld [vmem:[#allocation2 + $0x3c0] sm:$0xff]
    %v167 = vld [vmem:[#allocation2 + $0x3c8] sm:$0xff]
    %v168 = vld [vmem:[#allocation2 + $0x3d0] sm:$0xff]
    %v169 = vld [vmem:[#allocation2 + $0x3d8] sm:$0xff]
    %v170 = vld [vmem:[#allocation2 + $0x3e0] sm:$0xff]
    %v171 = vld [vmem:[#allocation2 + $0x3e8] sm:$0xff]
    %v172 = vld [vmem:[#allocation2 + $0x3f0] sm:$0xff]
    %v173 = vld [vmem:[#allocation2 + $0x3f8] sm:$0xff]
    %vm174 = vcmp.ne.f32.partialorder %v46, 0.0
    %vm175 = vcmp.ne.f32.partialorder %v47, 0.0
    %vm176 = vcmp.ne.f32.partialorder %v48, 0.0
    %vm177 = vcmp.ne.f32.partialorder %v49, 0.0
    %vm178 = vcmp.ne.f32.partialorder %v50, 0.0
    %vm179 = vcmp.ne.f32.partialorder %v51, 0.0
    %vm180 = vcmp.ne.f32.partialorder %v52, 0.0
    %vm181 = vcmp.ne.f32.partialorder %v53, 0.0
    %vm182 = vcmp.ne.f32.partialorder %v54, 0.0
    %vm183 = vcmp.ne.f32.partialorder %v55, 0.0
    %vm184 = vcmp.ne.f32.partialorder %v56, 0.0
    %vm185 = vcmp.ne.f32.partialorder %v57, 0.0
    %vm186 = vcmp.ne.f32.partialorder %v58, 0.0
    %vm187 = vcmp.ne.f32.partialorder %v59, 0.0
    %vm188 = vcmp.ne.f32.partialorder %v60, 0.0
    %vm189 = vcmp.ne.f32.partialorder %v61, 0.0
    %vm190 = vcmp.ne.f32.partialorder %v62, 0.0
    %vm191 = vcmp.ne.f32.partialorder %v63, 0.0
    %vm192 = vcmp.ne.f32.partialorder %v64, 0.0
    %vm193 = vcmp.ne.f32.partialorder %v65, 0.0
    %vm194 = vcmp.ne.f32.partialorder %v66, 0.0
    %vm195 = vcmp.ne.f32.partialorder %v67, 0.0
    %vm196 = vcmp.ne.f32.partialorder %v68, 0.0
    %vm197 = vcmp.ne.f32.partialorder %v69, 0.0
    %vm198 = vcmp.ne.f32.partialorder %v70, 0.0
    %vm199 = vcmp.ne.f32.partialorder %v71, 0.0
    %vm200 = vcmp.ne.f32.partialorder %v72, 0.0
    %vm201 = vcmp.ne.f32.partialorder %v73, 0.0
    %vm202 = vcmp.ne.f32.partialorder %v74, 0.0
    %vm203 = vcmp.ne.f32.partialorder %v75, 0.0
    %vm204 = vcmp.ne.f32.partialorder %v76, 0.0
    %vm205 = vcmp.ne.f32.partialorder %v77, 0.0
    %vm206 = vcmp.ne.f32.partialorder %v78, 0.0
    %vm207 = vcmp.ne.f32.partialorder %v79, 0.0
    %vm208 = vcmp.ne.f32.partialorder %v80, 0.0
    %vm209 = vcmp.ne.f32.partialorder %v81, 0.0
    %vm210 = vcmp.ne.f32.partialorder %v82, 0.0
    %vm211 = vcmp.ne.f32.partialorder %v83, 0.0
    %vm212 = vcmp.ne.f32.partialorder %v84, 0.0
    %vm213 = vcmp.ne.f32.partialorder %v85, 0.0
    %vm214 = vcmp.ne.f32.partialorder %v86, 0.0
    %vm215 = vcmp.ne.f32.partialorder %v87, 0.0
    %vm216 = vcmp.ne.f32.partialorder %v88, 0.0
    %vm217 = vcmp.ne.f32.partialorder %v89, 0.0
    %vm218 = vcmp.ne.f32.partialorder %v90, 0.0
    %vm219 = vcmp.ne.f32.partialorder %v91, 0.0
    %vm220 = vcmp.ne.f32.partialorder %v92, 0.0
    %vm221 = vcmp.ne.f32.partialorder %v93, 0.0
    %vm222 = vcmp.ne.f32.partialorder %v94, 0.0
    %vm223 = vcmp.ne.f32.partialorder %v95, 0.0
    %vm224 = vcmp.ne.f32.partialorder %v96, 0.0
    %vm225 = vcmp.ne.f32.partialorder %v97, 0.0
    %vm226 = vcmp.ne.f32.partialorder %v98, 0.0
    %vm227 = vcmp.ne.f32.partialorder %v99, 0.0
    %vm228 = vcmp.ne.f32.partialorder %v100, 0.0
    %vm229 = vcmp.ne.f32.partialorder %v101, 0.0
    %vm230 = vcmp.ne.f32.partialorder %v102, 0.0
    %vm231 = vcmp.ne.f32.partialorder %v103, 0.0
    %vm232 = vcmp.ne.f32.partialorder %v104, 0.0
    %vm233 = vcmp.ne.f32.partialorder %v105, 0.0
    %vm234 = vcmp.ne.f32.partialorder %v106, 0.0
    %vm235 = vcmp.ne.f32.partialorder %v107, 0.0
    %vm236 = vcmp.ne.f32.partialorder %v108, 0.0
    %vm237 = vcmp.ne.f32.partialorder %v109, 0.0
    %vm238 = vcmp.ne.f32.partialorder %v110, 0.0
    %vm239 = vcmp.ne.f32.partialorder %v111, 0.0
    %vm240 = vcmp.ne.f32.partialorder %v112, 0.0
    %vm241 = vcmp.ne.f32.partialorder %v113, 0.0
    %vm242 = vcmp.ne.f32.partialorder %v114, 0.0
    %vm243 = vcmp.ne.f32.partialorder %v115, 0.0
    %vm244 = vcmp.ne.f32.partialorder %v116, 0.0
    %vm245 = vcmp.ne.f32.partialorder %v117, 0.0
    %vm246 = vcmp.ne.f32.partialorder %v118, 0.0
    %vm247 = vcmp.ne.f32.partialorder %v119, 0.0
    %vm248 = vcmp.ne.f32.partialorder %v120, 0.0
    %vm249 = vcmp.ne.f32.partialorder %v121, 0.0
    %vm250 = vcmp.ne.f32.partialorder %v122, 0.0
    %vm251 = vcmp.ne.f32.partialorder %v123, 0.0
    %vm252 = vcmp.ne.f32.partialorder %v124, 0.0
    %vm253 = vcmp.ne.f32.partialorder %v125, 0.0
    %vm254 = vcmp.ne.f32.partialorder %v126, 0.0
    %vm255 = vcmp.ne.f32.partialorder %v127, 0.0
    %vm256 = vcmp.ne.f32.partialorder %v128, 0.0
    %vm257 = vcmp.ne.f32.partialorder %v129, 0.0
    %vm258 = vcmp.ne.f32.partialorder %v130, 0.0
    %vm259 = vcmp.ne.f32.partialorder %v131, 0.0
    %vm260 = vcmp.ne.f32.partialorder %v132, 0.0
    %vm261 = vcmp.ne.f32.partialorder %v133, 0.0
    %vm262 = vcmp.ne.f32.partialorder %v134, 0.0
    %vm263 = vcmp.ne.f32.partialorder %v135, 0.0
    %vm264 = vcmp.ne.f32.partialorder %v136, 0.0
    %vm265 = vcmp.ne.f32.partialorder %v137, 0.0
    %vm266 = vcmp.ne.f32.partialorder %v138, 0.0
    %vm267 = vcmp.ne.f32.partialorder %v139, 0.0
    %vm268 = vcmp.ne.f32.partialorder %v140, 0.0
    %vm269 = vcmp.ne.f32.partialorder %v141, 0.0
    %vm270 = vcmp.ne.f32.partialorder %v142, 0.0
    %vm271 = vcmp.ne.f32.partialorder %v143, 0.0
    %vm272 = vcmp.ne.f32.partialorder %v144, 0.0
    %vm273 = vcmp.ne.f32.partialorder %v145, 0.0
    %vm274 = vcmp.ne.f32.partialorder %v146, 0.0
    %vm275 = vcmp.ne.f32.partialorder %v147, 0.0
    %vm276 = vcmp.ne.f32.partialorder %v148, 0.0
    %vm277 = vcmp.ne.f32.partialorder %v149, 0.0
    %vm278 = vcmp.ne.f32.partialorder %v150, 0.0
    %vm279 = vcmp.ne.f32.partialorder %v151, 0.0
    %vm280 = vcmp.ne.f32.partialorder %v152, 0.0
    %vm281 = vcmp.ne.f32.partialorder %v153, 0.0
    %vm282 = vcmp.ne.f32.partialorder %v154, 0.0
    %vm283 = vcmp.ne.f32.partialorder %v155, 0.0
    %vm284 = vcmp.ne.f32.partialorder %v156, 0.0
    %vm285 = vcmp.ne.f32.partialorder %v157, 0.0
    %vm286 = vcmp.ne.f32.partialorder %v158, 0.0
    %vm287 = vcmp.ne.f32.partialorder %v159, 0.0
    %vm288 = vcmp.ne.f32.partialorder %v160, 0.0
    %vm289 = vcmp.ne.f32.partialorder %v161, 0.0
    %vm290 = vcmp.ne.f32.partialorder %v162, 0.0
    %vm291 = vcmp.ne.f32.partialorder %v163, 0.0
    %vm292 = vcmp.ne.f32.partialorder %v164, 0.0
    %vm293 = vcmp.ne.f32.partialorder %v165, 0.0
    %vm294 = vcmp.ne.f32.partialorder %v166, 0.0
    %vm295 = vcmp.ne.f32.partialorder %v167, 0.0
    %vm296 = vcmp.ne.f32.partialorder %v168, 0.0
    %vm297 = vcmp.ne.f32.partialorder %v169, 0.0
    %vm298 = vcmp.ne.f32.partialorder %v170, 0.0
    %vm299 = vcmp.ne.f32.partialorder %v171, 0.0
    %vm300 = vcmp.ne.f32.partialorder %v172, 0.0
    %vm301 = vcmp.ne.f32.partialorder %v173, 0.0
    %v302 = vsel %vm174, 1, 0
    %v303 = vsel %vm175, 1, 0
    %v304 = vsel %vm176, 1, 0
    %v305 = vsel %vm177, 1, 0
    %v306 = vsel %vm178, 1, 0
    %v307 = vsel %vm179, 1, 0
    %v308 = vsel %vm180, 1, 0
    %v309 = vsel %vm181, 1, 0
    %v310 = vsel %vm182, 1, 0
    %v311 = vsel %vm183, 1, 0
    %v312 = vsel %vm184, 1, 0
    %v313 = vsel %vm185, 1, 0
    %v314 = vsel %vm186, 1, 0
    %v315 = vsel %vm187, 1, 0
    %v316 = vsel %vm188, 1, 0
    %v317 = vsel %vm189, 1, 0
    %v318 = vsel %vm190, 1, 0
    %v319 = vsel %vm191, 1, 0
    %v320 = vsel %vm192, 1, 0
    %v321 = vsel %vm193, 1, 0
    %v322 = vsel %vm194, 1, 0
    %v323 = vsel %vm195, 1, 0
    %v324 = vsel %vm196, 1, 0
    %v325 = vsel %vm197, 1, 0
    %v326 = vsel %vm198, 1, 0
    %v327 = vsel %vm199, 1, 0
    %v328 = vsel %vm200, 1, 0
    %v329 = vsel %vm201, 1, 0
    %v330 = vsel %vm202, 1, 0
    %v331 = vsel %vm203, 1, 0
    %v332 = vsel %vm204, 1, 0
    %v333 = vsel %vm205, 1, 0
    %v334 = vsel %vm206, 1, 0
    %v335 = vsel %vm207, 1, 0
    %v336 = vsel %vm208, 1, 0
    %v337 = vsel %vm209, 1, 0
    %v338 = vsel %vm210, 1, 0
    %v339 = vsel %vm211, 1, 0
    %v340 = vsel %vm212, 1, 0
    %v341 = vsel %vm213, 1, 0
    %v342 = vsel %vm214, 1, 0
    %v343 = vsel %vm215, 1, 0
    %v344 = vsel %vm216, 1, 0
    %v345 = vsel %vm217, 1, 0
    %v346 = vsel %vm218, 1, 0
    %v347 = vsel %vm219, 1, 0
    %v348 = vsel %vm220, 1, 0
    %v349 = vsel %vm221, 1, 0
    %v350 = vsel %vm222, 1, 0
    %v351 = vsel %vm223, 1, 0
    %v352 = vsel %vm224, 1, 0
    %v353 = vsel %vm225, 1, 0
    %v354 = vsel %vm226, 1, 0
    %v355 = vsel %vm227, 1, 0
    %v356 = vsel %vm228, 1, 0
    %v357 = vsel %vm229, 1, 0
    %v358 = vsel %vm230, 1, 0
    %v359 = vsel %vm231, 1, 0
    %v360 = vsel %vm232, 1, 0
    %v361 = vsel %vm233, 1, 0
    %v362 = vsel %vm234, 1, 0
    %v363 = vsel %vm235, 1, 0
    %v364 = vsel %vm236, 1, 0
    %v365 = vsel %vm237, 1, 0
    %v366 = vsel %vm238, 1, 0
    %v367 = vsel %vm239, 1, 0
    %v368 = vsel %vm240, 1, 0
    %v369 = vsel %vm241, 1, 0
    %v370 = vsel %vm242, 1, 0
    %v371 = vsel %vm243, 1, 0
    %v372 = vsel %vm244, 1, 0
    %v373 = vsel %vm245, 1, 0
    %v374 = vsel %vm246, 1, 0
    %v375 = vsel %vm247, 1, 0
    %v376 = vsel %vm248, 1, 0
    %v377 = vsel %vm249, 1, 0
    %v378 = vsel %vm250, 1, 0
    %v379 = vsel %vm251, 1, 0
    %v380 = vsel %vm252, 1, 0
    %v381 = vsel %vm253, 1, 0
    %v382 = vsel %vm254, 1, 0
    %v383 = vsel %vm255, 1, 0
    %v384 = vsel %vm256, 1, 0
    %v385 = vsel %vm257, 1, 0
    %v386 = vsel %vm258, 1, 0
    %v387 = vsel %vm259, 1, 0
    %v388 = vsel %vm260, 1, 0
    %v389 = vsel %vm261, 1, 0
    %v390 = vsel %vm262, 1, 0
    %v391 = vsel %vm263, 1, 0
    %v392 = vsel %vm264, 1, 0
    %v393 = vsel %vm265, 1, 0
    %v394 = vsel %vm266, 1, 0
    %v395 = vsel %vm267, 1, 0
    %v396 = vsel %vm268, 1, 0
    %v397 = vsel %vm269, 1, 0
    %v398 = vsel %vm270, 1, 0
    %v399 = vsel %vm271, 1, 0
    %v400 = vsel %vm272, 1, 0
    %v401 = vsel %vm273, 1, 0
    %v402 = vsel %vm274, 1, 0
    %v403 = vsel %vm275, 1, 0
    %v404 = vsel %vm276, 1, 0
    %v405 = vsel %vm277, 1, 0
    %v406 = vsel %vm278, 1, 0
    %v407 = vsel %vm279, 1, 0
    %v408 = vsel %vm280, 1, 0
    %v409 = vsel %vm281, 1, 0
    %v410 = vsel %vm282, 1, 0
    %v411 = vsel %vm283, 1, 0
    %v412 = vsel %vm284, 1, 0
    %v413 = vsel %vm285, 1, 0
    %v414 = vsel %vm286, 1, 0
    %v415 = vsel %vm287, 1, 0
    %v416 = vsel %vm288, 1, 0
    %v417 = vsel %vm289, 1, 0
    %v418 = vsel %vm290, 1, 0
    %v419 = vsel %vm291, 1, 0
    %v420 = vsel %vm292, 1, 0
    %v421 = vsel %vm293, 1, 0
    %v422 = vsel %vm294, 1, 0
    %v423 = vsel %vm295, 1, 0
    %v424 = vsel %vm296, 1, 0
    %v425 = vsel %vm297, 1, 0
    %v426 = vsel %vm298, 1, 0
    %v427 = vsel %vm299, 1, 0
    %v428 = vsel %vm300, 1, 0
    %v429 = vsel %vm301, 1, 0
    %v430 = vld [vmem:[%s1] sm:$0xff]
    %v431 = vld [vmem:[%s1 + $0x8] sm:$0xff]
    %v432 = vld [vmem:[%s1 + $0x10] sm:$0xff]
    %v433 = vld [vmem:[%s1 + $0x18] sm:$0xff]
    %v434 = vadd.f32 %v46, %v50
    %v435 = vadd.f32 %v434, %v54
    %v436 = vadd.f32 %v435, %v58
    %v437 = vadd.f32 %v436, %v62
    %v438 = vadd.f32 %v437, %v66
    %v439 = vadd.f32 %v438, %v70
    %v440 = vadd.f32 %v439, %v74
    %v441 = vadd.f32 %v440, %v78
    %v442 = vadd.f32 %v441, %v82
    %v443 = vadd.f32 %v442, %v86
    %v444 = vadd.f32 %v443, %v90
    %v445 = vadd.f32 %v444, %v94
    %v446 = vadd.f32 %v445, %v98
    %v447 = vadd.f32 %v446, %v102
    %v448 = vadd.f32 %v447, %v106
    %v449 = vadd.f32 %v448, %v110
    %v450 = vadd.f32 %v449, %v114
    %v451 = vadd.f32 %v450, %v118
    %v452 = vadd.f32 %v451, %v122
    %v453 = vadd.f32 %v452, %v126
    %v454 = vadd.f32 %v453, %v130
    %v455 = vadd.f32 %v454, %v134
    %v456 = vadd.f32 %v455, %v138
    %v457 = vadd.f32 %v456, %v142
    %v458 = vadd.f32 %v457, %v146
    %v459 = vadd.f32 %v458, %v150
    %v460 = vadd.f32 %v459, %v154
    %v461 = vadd.f32 %v460, %v158
    %v462 = vadd.f32 %v461, %v162
    %v463 = vadd.f32 %v462, %v166
    %v464 = vadd.f32 %v463, %v170
    %v465 = vadd.f32 %v47, %v51
    %v466 = vadd.f32 %v465, %v55
    %v467 = vadd.f32 %v466, %v59
    %v468 = vadd.f32 %v467, %v63
    %v469 = vadd.f32 %v468, %v67
    %v470 = vadd.f32 %v469, %v71
    %v471 = vadd.f32 %v470, %v75
    %v472 = vadd.f32 %v471, %v79
    %v473 = vadd.f32 %v472, %v83
    %v474 = vadd.f32 %v473, %v87
    %v475 = vadd.f32 %v474, %v91
    %v476 = vadd.f32 %v475, %v95
    %v477 = vadd.f32 %v476, %v99
    %v478 = vadd.f32 %v477, %v103
    %v479 = vadd.f32 %v478, %v107
    %v480 = vadd.f32 %v479, %v111
    %v481 = vadd.f32 %v480, %v115
    %v482 = vadd.f32 %v481, %v119
    %v483 = vadd.f32 %v482, %v123
    %v484 = vadd.f32 %v483, %v127
    %v485 = vadd.f32 %v484, %v131
    %v486 = vadd.f32 %v485, %v135
    %v487 = vadd.f32 %v486, %v139
    %v488 = vadd.f32 %v487, %v143
    %v489 = vadd.f32 %v488, %v147
    %v490 = vadd.f32 %v489, %v151
    %v491 = vadd.f32 %v490, %v155
    %v492 = vadd.f32 %v491, %v159
    %v493 = vadd.f32 %v492, %v163
    %v494 = vadd.f32 %v493, %v167
    %v495 = vadd.f32 %v494, %v171
    %v496 = vadd.f32 %v48, %v52
    %v497 = vadd.f32 %v496, %v56
    %v498 = vadd.f32 %v497, %v60
    %v499 = vadd.f32 %v498, %v64
    %v500 = vadd.f32 %v499, %v68
    %v501 = vadd.f32 %v500, %v72
    %v502 = vadd.f32 %v501, %v76
    %v503 = vadd.f32 %v502, %v80
    %v504 = vadd.f32 %v503, %v84
    %v505 = vadd.f32 %v504, %v88
    %v506 = vadd.f32 %v505, %v92
    %v507 = vadd.f32 %v506, %v96
    %v508 = vadd.f32 %v507, %v100
    %v509 = vadd.f32 %v508, %v104
    %v510 = vadd.f32 %v509, %v108
    %v511 = vadd.f32 %v510, %v112
    %v512 = vadd.f32 %v511, %v116
    %v513 = vadd.f32 %v512, %v120
    %v514 = vadd.f32 %v513, %v124
    %v515 = vadd.f32 %v514, %v128
    %v516 = vadd.f32 %v515, %v132
    %v517 = vadd.f32 %v516, %v136
    %v518 = vadd.f32 %v517, %v140
    %v519 = vadd.f32 %v518, %v144
    %v520 = vadd.f32 %v519, %v148
    %v521 = vadd.f32 %v520, %v152
    %v522 = vadd.f32 %v521, %v156
    %v523 = vadd.f32 %v522, %v160
    %v524 = vadd.f32 %v523, %v164
    %v525 = vadd.f32 %v524, %v168
    %v526 = vadd.f32 %v525, %v172
    %v527 = vadd.f32 %v49, %v53
    %v528 = vadd.f32 %v527, %v57
    %v529 = vadd.f32 %v528, %v61
    %v530 = vadd.f32 %v529, %v65
    %v531 = vadd.f32 %v530, %v69
    %v532 = vadd.f32 %v531, %v73
    %v533 = vadd.f32 %v532, %v77
    %v534 = vadd.f32 %v533, %v81
    %v535 = vadd.f32 %v534, %v85
    %v536 = vadd.f32 %v535, %v89
    %v537 = vadd.f32 %v536, %v93
    %v538 = vadd.f32 %v537, %v97
    %v539 = vadd.f32 %v538, %v101
    %v540 = vadd.f32 %v539, %v105
    %v541 = vadd.f32 %v540, %v109
    %v542 = vadd.f32 %v541, %v113
    %v543 = vadd.f32 %v542, %v117
    %v544 = vadd.f32 %v543, %v121
    %v545 = vadd.f32 %v544, %v125
    %v546 = vadd.f32 %v545, %v129
    %v547 = vadd.f32 %v546, %v133
    %v548 = vadd.f32 %v547, %v137
    %v549 = vadd.f32 %v548, %v141
    %v550 = vadd.f32 %v549, %v145
    %v551 = vadd.f32 %v550, %v149
    %v552 = vadd.f32 %v551, %v153
    %v553 = vadd.f32 %v552, %v157
    %v554 = vadd.f32 %v553, %v161
    %v555 = vadd.f32 %v554, %v165
    %v556 = vadd.f32 %v555, %v169
    %v557 = vadd.f32 %v556, %v173
    %v558 = vadd.f32 %v430, %v464
    %v559 = vadd.f32 %v431, %v495
    %v560 = vadd.f32 %v432, %v526
    %v561 = vadd.f32 %v433, %v557
    %562 = vst [vmem:[%s1] sm:$0xff] %v558
    %563 = vst [vmem:[%s1 + $0x8] sm:$0xff] %v559
    %564 = vst [vmem:[%s1 + $0x10] sm:$0xff] %v560
    %565 = vst [vmem:[%s1 + $0x18] sm:$0xff] %v561
    %v566 = vld [vmem:[%s2] sm:$0xff]
    %v567 = vld [vmem:[%s2 + $0x8] sm:$0xff]
    %v568 = vld [vmem:[%s2 + $0x10] sm:$0xff]
    %v569 = vld [vmem:[%s2 + $0x18] sm:$0xff]
    %v570 = vadd.s32 %v302, %v306
    %v571 = vadd.s32 %v570, %v310
    %v572 = vadd.s32 %v571, %v314
    %v573 = vadd.s32 %v572, %v318
    %v574 = vadd.s32 %v573, %v322
    %v575 = vadd.s32 %v574, %v326
    %v576 = vadd.s32 %v575, %v330
    %v577 = vadd.s32 %v576, %v334
    %v578 = vadd.s32 %v577, %v338
    %v579 = vadd.s32 %v578, %v342
    %v580 = vadd.s32 %v579, %v346
    %v581 = vadd.s32 %v580, %v350
    %v582 = vadd.s32 %v581, %v354
    %v583 = vadd.s32 %v582, %v358
    %v584 = vadd.s32 %v583, %v362
    %v585 = vadd.s32 %v584, %v366
    %v586 = vadd.s32 %v585, %v370
    %v587 = vadd.s32 %v586, %v374
    %v588 = vadd.s32 %v587, %v378
    %v589 = vadd.s32 %v588, %v382
    %v590 = vadd.s32 %v589, %v386
    %v591 = vadd.s32 %v590, %v390
    %v592 = vadd.s32 %v591, %v394
    %v593 = vadd.s32 %v592, %v398
    %v594 = vadd.s32 %v593, %v402
    %v595 = vadd.s32 %v594, %v406
    %v596 = vadd.s32 %v595, %v410
    %v597 = vadd.s32 %v596, %v414
    %v598 = vadd.s32 %v597, %v418
    %v599 = vadd.s32 %v598, %v422
    %v600 = vadd.s32 %v599, %v426
    %v601 = vadd.s32 %v303, %v307
    %v602 = vadd.s32 %v601, %v311
    %v603 = vadd.s32 %v602, %v315
    %v604 = vadd.s32 %v603, %v319
    %v605 = vadd.s32 %v604, %v323
    %v606 = vadd.s32 %v605, %v327
    %v607 = vadd.s32 %v606, %v331
    %v608 = vadd.s32 %v607, %v335
    %v609 = vadd.s32 %v608, %v339
    %v610 = vadd.s32 %v609, %v343
    %v611 = vadd.s32 %v610, %v347
    %v612 = vadd.s32 %v611, %v351
    %v613 = vadd.s32 %v612, %v355
    %v614 = vadd.s32 %v613, %v359
    %v615 = vadd.s32 %v614, %v363
    %v616 = vadd.s32 %v615, %v367
    %v617 = vadd.s32 %v616, %v371
    %v618 = vadd.s32 %v617, %v375
    %v619 = vadd.s32 %v618, %v379
    %v620 = vadd.s32 %v619, %v383
    %v621 = vadd.s32 %v620, %v387
    %v622 = vadd.s32 %v621, %v391
    %v623 = vadd.s32 %v622, %v395
    %v624 = vadd.s32 %v623, %v399
    %v625 = vadd.s32 %v624, %v403
    %v626 = vadd.s32 %v625, %v407
    %v627 = vadd.s32 %v626, %v411
    %v628 = vadd.s32 %v627, %v415
    %v629 = vadd.s32 %v628, %v419
    %v630 = vadd.s32 %v629, %v423
    %v631 = vadd.s32 %v630, %v427
    %v632 = vadd.s32 %v304, %v308
    %v633 = vadd.s32 %v632, %v312
    %v634 = vadd.s32 %v633, %v316
    %v635 = vadd.s32 %v634, %v320
    %v636 = vadd.s32 %v635, %v324
    %v637 = vadd.s32 %v636, %v328
    %v638 = vadd.s32 %v637, %v332
    %v639 = vadd.s32 %v638, %v336
    %v640 = vadd.s32 %v639, %v340
    %v641 = vadd.s32 %v640, %v344
    %v642 = vadd.s32 %v641, %v348
    %v643 = vadd.s32 %v642, %v352
    %v644 = vadd.s32 %v643, %v356
    %v645 = vadd.s32 %v644, %v360
    %v646 = vadd.s32 %v645, %v364
    %v647 = vadd.s32 %v646, %v368
    %v648 = vadd.s32 %v647, %v372
    %v649 = vadd.s32 %v648, %v376
    %v650 = vadd.s32 %v649, %v380
    %v651 = vadd.s32 %v650, %v384
    %v652 = vadd.s32 %v651, %v388
    %v653 = vadd.s32 %v652, %v392
    %v654 = vadd.s32 %v653, %v396
    %v655 = vadd.s32 %v654, %v400
    %v656 = vadd.s32 %v655, %v404
    %v657 = vadd.s32 %v656, %v408
    %v658 = vadd.s32 %v657, %v412
    %v659 = vadd.s32 %v658, %v416
    %v660 = vadd.s32 %v659, %v420
    %v661 = vadd.s32 %v660, %v424
    %v662 = vadd.s32 %v661, %v428
    %v663 = vadd.s32 %v305, %v309
    %v664 = vadd.s32 %v663, %v313
    %v665 = vadd.s32 %v664, %v317
    %v666 = vadd.s32 %v665, %v321
    %v667 = vadd.s32 %v666, %v325
    %v668 = vadd.s32 %v667, %v329
    %v669 = vadd.s32 %v668, %v333
    %v670 = vadd.s32 %v669, %v337
    %v671 = vadd.s32 %v670, %v341
    %v672 = vadd.s32 %v671, %v345
    %v673 = vadd.s32 %v672, %v349
    %v674 = vadd.s32 %v673, %v353
    %v675 = vadd.s32 %v674, %v357
    %v676 = vadd.s32 %v675, %v361
    %v677 = vadd.s32 %v676, %v365
    %v678 = vadd.s32 %v677, %v369
    %v679 = vadd.s32 %v678, %v373
    %v680 = vadd.s32 %v679, %v377
    %v681 = vadd.s32 %v680, %v381
    %v682 = vadd.s32 %v681, %v385
    %v683 = vadd.s32 %v682, %v389
    %v684 = vadd.s32 %v683, %v393
    %v685 = vadd.s32 %v684, %v397
    %v686 = vadd.s32 %v685, %v401
    %v687 = vadd.s32 %v686, %v405
    %v688 = vadd.s32 %v687, %v409
    %v689 = vadd.s32 %v688, %v413
    %v690 = vadd.s32 %v689, %v417
    %v691 = vadd.s32 %v690, %v421
    %v692 = vadd.s32 %v691, %v425
    %v693 = vadd.s32 %v692, %v429
    %v694 = vadd.s32 %v566, %v600
    %v695 = vadd.s32 %v567, %v631
    %v696 = vadd.s32 %v568, %v662
    %v697 = vadd.s32 %v569, %v693
    %698 = vst [vmem:[%s2] sm:$0xff] %v694
    %699 = vst [vmem:[%s2 + $0x8] sm:$0xff] %v695
    %700 = vst [vmem:[%s2 + $0x10] sm:$0xff] %v696
    %701 = vst [vmem:[%s2 + $0x18] sm:$0xff] %v697
    // Predicated region
    $region14: #{_scalar_update.1} parent=1 // pred_check
      _
    $region15: #{_scalar_update.1} parent=1 // pred_check_branch
      %703 = sbr.rel (0) target = $region17
    $region16: #{_scalar_update.1} parent=1 // pred_region
      _
    $region17: #{_scalar_update.1} parent=1 // pred_fallthru
      _
    // Predicated region
    $region18: #{_scalar_update.1} parent=1 // pred_check
      _
    $region19: #{_scalar_update.1} parent=1 // pred_check_branch
      %705 = sbr.rel (0) target = $region21
    $region20: #{_scalar_update.1} parent=1 // pred_region
      _
    $region21: #{_scalar_update.1} parent=1 // pred_fallthru
      _
    // Predicated region
    $region22: #{_scalar_update.1} parent=1 // pred_check
      _
    $region23: #{_scalar_update.1} parent=1 // pred_check_branch
      %707 = sbr.rel (0) target = $region25
    $region24: #{_scalar_update.1} parent=1 // pred_region
      _
    $region25: #{_scalar_update.1} parent=1 // pred_fallthru
      _
    // Predicated region
    $region26: #{_scalar_update.1} parent=1 // pred_check
      _
    $region27: #{_scalar_update.1} parent=1 // pred_check_branch
      %709 = sbr.rel (0) target = $region29
    $region28: #{_scalar_update.1} parent=1 // pred_region
      _
    $region29: #{_scalar_update.1} parent=1 // pred_fallthru
      _
    %710 = vsyncpa [#allocation3], 1

</llo_original>
